<compile_context>
chip_gen: v5e
topology: v5e:2x2
jax: 0.10.0
libtpu: 0.0.40
codegen_flags: <defaults>
</compile_context>

<pallas_src>
import jax
import jax.numpy as jnp
from jax.experimental import pallas as pl
from jax.experimental.pallas import tpu as pltpu


def _sigmoid(x):
    # exp lands on the EUP slot; the divide only touches (Bt,C)/(Bt,hidden) elems.
    return 1.0 / (1.0 + jnp.exp(-x))


def _pad_to(v, m):
    return -(-v // m) * m


def _sublanes(dtype):
    # f32 -> 8, bf16 -> 16, int8/fp8 -> 32 (sub-32-bit dtypes pack along sublanes).
    return max(8, 32 // jnp.dtype(dtype).itemsize)


def _padded_2d_bytes(rows, cols, dtype):
    """VMEM footprint of a (rows, cols) tile after (sublane, 128-lane) padding."""
    return (_pad_to(rows, _sublanes(dtype)) * _pad_to(cols, 128)
            * jnp.dtype(dtype).itemsize)


def _make_se_kernel(use_mxu, inv_hw):
    """Fused squeeze-excitation kernel over a (Bt, C, HW) slab.

    use_mxu=True : wa = W1.T (C, hidden), wb = W2.T (hidden, C); MLP on the MXU.
    use_mxu=False: wa = W1.T (C, hidden), wb = W2   (C, hidden); tiny VPU MLP kept
                   channels-on-sublanes so the gate broadcasts straight onto
                   (C, HW) with no lane<->sublane relayout.
    """

    def kernel(x_ref, wa_ref, wb_ref, o_ref):
        f32 = jnp.float32
        if use_mxu:
            # Squeeze: f32-accumulated mean over the spatial (lane) axis.
            pooled = jnp.sum(x_ref[...], axis=-1, dtype=f32) * inv_hw        # (Bt, C)
            h = jnp.dot(pooled, wa_ref[...].astype(f32),
                        preferred_element_type=f32)                          # (Bt, hidden)
            h = h * _sigmoid(h)                                              # SiLU
            g = jnp.dot(h, wb_ref[...].astype(f32),
                        preferred_element_type=f32)                          # (Bt, C)
            gate = _sigmoid(g)[:, :, None]                                   # (Bt, C, 1)
        else:
            pooled = jnp.sum(x_ref[...], axis=-1, keepdims=True,
                             dtype=f32) * inv_hw                             # (Bt, C, 1)
            wa = wa_ref[...].astype(f32)                                     # (C, hidden)
            wb = wb_ref[...].astype(f32)                                     # (C, hidden)
            # h[b, j] = sum_c pooled[b, c] * W1[j, c]
            h = jnp.sum(pooled * wa[None, :, :], axis=1, keepdims=True)      # (Bt, 1, hidden)
            h = h * _sigmoid(h)                                              # SiLU
            # g[b, c] = sum_j h[b, j] * W2[c, j]   (lane-axis reduction)
            g = jnp.sum(h * wb[None, :, :], axis=-1, keepdims=True)          # (Bt, C, 1)
            gate = _sigmoid(g)                                               # (Bt, C, 1)

        # Excite: re-read x and rescale in the *input* dtype; no f32 copy of the
        # slab is kept live across the MLP (bf16 VPU multiply on v6e/v7x).
        gate = gate.astype(x_ref.dtype)
        o_ref[...] = (x_ref[...] * gate).astype(o_ref.dtype)

    return kernel


def squeeze_excitation(x, w1, w2):
    """x: (N, C, H, W); w1: (hidden, C) = Linear(dim->hidden, bias=False).weight;
    w2: (C, hidden) = Linear(hidden->dim, bias=False).weight. Returns (N, C, H, W)."""
    N, C, H, W = x.shape
    HW = H * W
    hidden = w1.shape[0]
    assert w1.shape == (hidden, C) and w2.shape == (C, hidden)

    # Free, contiguous reshape: NCHW -> (N, C, H*W) so spatial sits on lanes.
    # (For 7x7-style layers with C % 128 == 0 a channels-last layout would be
    # lane-denser, but would require an extra HBM transpose pass of x upstream.)
    x3d = x.reshape(N, C, HW)

    # Large-C layers run the MLP on the MXU; small-C layers keep the VPU MLP.
    use_mxu = (C >= 128) and (hidden >= 8)
    wa = w1.T                                   # (C, hidden): tiny one-off transpose
    wb = w2.T if use_mxu else w2                # (hidden, C) / (C, hidden)

    # --- VMEM budgeting from PADDED tile bytes, capped by real capacity -------
    try:
        vmem_cap = int(pltpu.get_tpu_info().vmem_capacity_bytes)
    except Exception:
        vmem_cap = 0
    if vmem_cap < (32 << 20):
        vmem_cap = 64 << 20                     # conservative (v7x per-TC) default
    budget = (vmem_cap * 3) // 4                # ~48 MiB on v7x, ~96 MiB on v5e/v6e

    per_sample = _padded_2d_bytes(C, HW, x.dtype)
    extras = 2 * (_padded_2d_bytes(*wa.shape, wa.dtype)
                  + _padded_2d_bytes(*wb.shape, wb.dtype)) + (2 << 20)

    # Batch several images per grid step (divisor of N) so each block reaches
    # ~2 MiB (amortizes per-step overhead) while in+out stay double-buffered.
    target_block = 2 << 20
    bt = 1
    for d in range(1, N + 1):
        if N % d:
            continue
        if 4 * d * per_sample + extras > budget:
            break
        bt = d
        if d * per_sample >= target_block:
            break

    double_ok = (4 * bt * per_sample + extras) <= budget
    # TODO(synk): two-pass fallback (pooled-gate kernel + tiled rescale kernel)
    # for slabs that do not fit in VMEM even single-buffered at bt=1.

    x_index = lambda b: (b, 0, 0)
    if double_ok:
        x_in_spec = pl.BlockSpec((bt, C, HW), x_index)
        x_out_spec = pl.BlockSpec((bt, C, HW), x_index)
    else:
        # Too big to double-buffer both directions: fall back to single buffering.
        x_in_spec = pl.BlockSpec((bt, C, HW), x_index, pipeline_mode=pl.Buffered(1))
        x_out_spec = pl.BlockSpec((bt, C, HW), x_index, pipeline_mode=pl.Buffered(1))

    bufs = 4 if double_ok else 2
    need = bufs * bt * per_sample + extras + (2 << 20)
    vmem_limit = int(max(32 << 20, min(budget, need)))

    out3d = pl.pallas_call(
        _make_se_kernel(use_mxu, float(1.0 / HW)),
        out_shape=jax.ShapeDtypeStruct((N, C, HW), x.dtype),
        grid_spec=pltpu.PrefetchScalarGridSpec(
            num_scalar_prefetch=0,
            grid=(N // bt,),
            in_specs=[
                x_in_spec,
                pl.BlockSpec(wa.shape, lambda b: (0, 0)),
                pl.BlockSpec(wb.shape, lambda b: (0, 0)),
            ],
            out_specs=x_out_spec,
        ),
        compiler_params=pltpu.CompilerParams(
            dimension_semantics=("parallel",),
            vmem_limit_bytes=vmem_limit,
        ),
    )(x3d, wa, wb)

    return out3d.reshape(N, C, H, W)


def _reference(x, w1, w2):
    # Pure-JAX reference matching the PyTorch SqueezeExcitation.forward
    pooled = jnp.mean(x, axis=(2, 3))                  # (N, C)
    h = pooled @ w1.T                                  # (N, hidden)
    h = h * jax.nn.sigmoid(h)                          # SiLU
    g = jax.nn.sigmoid(h @ w2.T)                       # (N, C)
    return x * g[:, :, None, None]


if __name__ == "__main__":
    key = jax.random.PRNGKey(0)
    N, C, H, W = 2, 4, 16, 16
    shrinkage_rate = 0.25
    hidden = int(C * shrinkage_rate)                   # = 1

    kx, k1, k2 = jax.random.split(key, 3)
    x = jax.random.normal(kx, (N, C, H, W), dtype=jnp.float32)
    # Deterministic stand-ins for the two bias-free Linear weights.
    w1 = jax.random.normal(k1, (hidden, C), dtype=jnp.float32) * 0.5
    w2 = jax.random.normal(k2, (C, hidden), dtype=jnp.float32) * 0.5

    out = jax.block_until_ready(squeeze_excitation(x, w1, w2))
    ref = _reference(x, w1, w2)

    assert out.shape == (N, C, H, W)
    assert jnp.allclose(out, ref, atol=1e-5, rtol=1e-5), "mismatch vs reference"
    print("KERNEL_OK")
</pallas_src>

<mosaic_0001>
module attributes {stable_mosaic.version = 11 : i64} {
  func.func @kernel(%arg0: i32, %arg1: memref<2x4x256xf32, #tpu.memory_space<vmem>>, %arg2: memref<4x1xf32, #tpu.memory_space<vmem>>, %arg3: memref<4x1xf32, #tpu.memory_space<vmem>>, %arg4: memref<2x4x256xf32, #tpu.memory_space<vmem>>) attributes {dimension_semantics = [#tpu.dimension_semantics<parallel>], iteration_bounds = array<i64: 1>, scalar_prefetch = 0 : i64, scratch_operands = 0 : i64, tpu.core_type = #tpu.core_type<tc>, window_params = [{transform_indices = @transform_0, window_bounds = array<i64: 2, 4, 256>}, {pipeline_mode = #tpu.pipeline_mode<synchronous>, transform_indices = @transform_1, window_bounds = array<i64: 4, 1>}, {pipeline_mode = #tpu.pipeline_mode<synchronous>, transform_indices = @transform_2, window_bounds = array<i64: 4, 1>}, {transform_indices = @transform_3, window_bounds = array<i64: 2, 4, 256>}]} {
    %c0 = arith.constant 0 : index
    %c0_0 = arith.constant 0 : index
    %c0_1 = arith.constant 0 : index
    %0 = vector.load %arg1[%c0, %c0_0, %c0_1] : memref<2x4x256xf32, #tpu.memory_space<vmem>>, vector<2x4x256xf32>
    %cst = arith.constant dense<0.000000e+00> : vector<2x4xf32>
    %1 = vector.multi_reduction <add>, %0, %cst [2] : vector<2x4x256xf32> to vector<2x4xf32>
    %2 = vector.shape_cast %1 : vector<2x4xf32> to vector<2x4x1xf32>
    %cst_2 = arith.constant 3.906250e-03 : f32
    %3 = vector.broadcast %cst_2 : f32 to vector<2x4x1xf32>
    %4 = arith.mulf %2, %3 : vector<2x4x1xf32>
    %c0_3 = arith.constant 0 : index
    %c0_4 = arith.constant 0 : index
    %5 = vector.load %arg2[%c0_3, %c0_4] : memref<4x1xf32, #tpu.memory_space<vmem>>, vector<4x1xf32>
    %c0_5 = arith.constant 0 : index
    %c0_6 = arith.constant 0 : index
    %6 = vector.load %arg3[%c0_5, %c0_6] : memref<4x1xf32, #tpu.memory_space<vmem>>, vector<4x1xf32>
    %7 = vector.shape_cast %5 : vector<4x1xf32> to vector<1x4x1xf32>
    %8 = vector.broadcast %7 : vector<1x4x1xf32> to vector<2x4x1xf32>
    %9 = arith.mulf %4, %8 : vector<2x4x1xf32>
    %cst_7 = arith.constant dense<0.000000e+00> : vector<2x1xf32>
    %10 = vector.multi_reduction <add>, %9, %cst_7 [1] : vector<2x4x1xf32> to vector<2x1xf32>
    %11 = vector.shape_cast %10 : vector<2x1xf32> to vector<2x1x1xf32>
    %cst_8 = arith.constant 0.000000e+00 : f32
    %12 = vector.broadcast %cst_8 : f32 to vector<2x1x1xf32>
    %13 = arith.subf %12, %11 : vector<2x1x1xf32>
    %14 = math.exp %13 : vector<2x1x1xf32>
    %cst_9 = arith.constant 1.000000e+00 : f32
    %15 = vector.broadcast %cst_9 : f32 to vector<2x1x1xf32>
    %16 = arith.addf %15, %14 : vector<2x1x1xf32>
    %cst_10 = arith.constant 1.000000e+00 : f32
    %17 = vector.broadcast %cst_10 : f32 to vector<2x1x1xf32>
    %18 = arith.divf %17, %16 : vector<2x1x1xf32>
    %19 = arith.mulf %11, %18 : vector<2x1x1xf32>
    %20 = vector.shape_cast %6 : vector<4x1xf32> to vector<1x4x1xf32>
    %21 = vector.broadcast %19 : vector<2x1x1xf32> to vector<2x4x1xf32>
    %22 = vector.broadcast %20 : vector<1x4x1xf32> to vector<2x4x1xf32>
    %23 = arith.mulf %21, %22 : vector<2x4x1xf32>
    %cst_11 = arith.constant dense<0.000000e+00> : vector<2x4xf32>
    %24 = vector.multi_reduction <add>, %23, %cst_11 [2] : vector<2x4x1xf32> to vector<2x4xf32>
    %25 = vector.shape_cast %24 : vector<2x4xf32> to vector<2x4x1xf32>
    %cst_12 = arith.constant 0.000000e+00 : f32
    %26 = vector.broadcast %cst_12 : f32 to vector<2x4x1xf32>
    %27 = arith.subf %26, %25 : vector<2x4x1xf32>
    %28 = math.exp %27 : vector<2x4x1xf32>
    %cst_13 = arith.constant 1.000000e+00 : f32
    %29 = vector.broadcast %cst_13 : f32 to vector<2x4x1xf32>
    %30 = arith.addf %29, %28 : vector<2x4x1xf32>
    %cst_14 = arith.constant 1.000000e+00 : f32
    %31 = vector.broadcast %cst_14 : f32 to vector<2x4x1xf32>
    %32 = arith.divf %31, %30 : vector<2x4x1xf32>
    %c0_15 = arith.constant 0 : index
    %c0_16 = arith.constant 0 : index
    %c0_17 = arith.constant 0 : index
    %33 = vector.load %arg1[%c0_15, %c0_16, %c0_17] : memref<2x4x256xf32, #tpu.memory_space<vmem>>, vector<2x4x256xf32>
    %34 = vector.broadcast %32 : vector<2x4x1xf32> to vector<2x4x256xf32>
    %35 = arith.mulf %33, %34 : vector<2x4x256xf32>
    %c0_18 = arith.constant 0 : index
    %c0_19 = arith.constant 0 : index
    %c0_20 = arith.constant 0 : index
    %36 = vector.load %arg4[%c0_18, %c0_19, %c0_20] : memref<2x4x256xf32, #tpu.memory_space<vmem>>, vector<2x4x256xf32>
    tpu.vector_store %arg4[%c0_18, %c0_19, %c0_20], %35 {strides = array<i32>} : memref<2x4x256xf32, #tpu.memory_space<vmem>>, vector<2x4x256xf32>,
    return
  }
  func.func @transform_0(%arg0: i32) -> (i32, i32, i32) {
    %c0_i32 = arith.constant 0 : i32
    %c0_i32_0 = arith.constant 0 : i32
    %c0_i32_1 = arith.constant 0 : i32
    return %arg0, %c0_i32, %c0_i32_0 : i32, i32, i32
  }
  func.func @transform_1(%arg0: i32) -> (i32, i32) {
    %c0_i32 = arith.constant 0 : i32
    %c0_i32_0 = arith.constant 0 : i32
    %c0_i32_1 = arith.constant 0 : i32
    return %c0_i32, %c0_i32_0 : i32, i32
  }
  func.func @transform_2(%arg0: i32) -> (i32, i32) {
    %c0_i32 = arith.constant 0 : i32
    %c0_i32_0 = arith.constant 0 : i32
    %c0_i32_1 = arith.constant 0 : i32
    return %c0_i32, %c0_i32_0 : i32, i32
  }
  func.func @transform_3(%arg0: i32) -> (i32, i32, i32) {
    %c0_i32 = arith.constant 0 : i32
    %c0_i32_0 = arith.constant 0 : i32
    %c0_i32_1 = arith.constant 0 : i32
    return %arg0, %c0_i32, %c0_i32_0 : i32, i32, i32
  }
}

</mosaic_0001>

<llo_original>
// kernel: tpu_custom_call.1
$region0: #{tpu_custom_call.1}
  #allocation0 [shape = 'u32[]', space=smem, size = 0x4, offset = 0x4, fixed_abs, tag = 'smem constant byte address 0x4 - core index']
  #allocation1 [shape = 'u32[72,128]{1,0:T(1,128)}', space=vmem, size = 0x9000, scoped, tag = 'internal scratch']
  %s0 = inlined_call_operand.hbm [shape: f32[2,4,256], index: 0, kind: input, shape index: {}]
  %s1 = inlined_call_operand.vmem [shape: f32[4,1], index: 1, kind: input, shape index: {}]
  %s2 = inlined_call_operand.vmem [shape: f32[4,1], index: 2, kind: input, shape index: {}]
  %s3 = inlined_call_operand.hbm [shape: f32[2,4,256], index: 3, kind: output, shape index: {}]
  %s4 = sld [smem:[#allocation0]]
  $region26: #{tpu_custom_call.1} parent=0
    _
  %s6 = ssub.s32 1, %s4
  %s7 = scalar_select 0, %s6, %s4
  $region1: #{tpu_custom_call.1} parent=0
    #allocation2 [shape = 'u8[8192]{0}', space=vmem, size = 0x2000, scoped, tag = 'input window, operand 0, single buffered']
    #allocation3 [shape = 's32[1]{0}', space=sflag, size = 0x4, scoped, tag = 'scoped memory for tpu_custom_call.1']
    #allocation4 [shape = 's32[1]{0}', space=sflag, size = 0x4, scoped, tag = 'scoped memory for tpu_custom_call.1']
    #allocation5 [shape = 'u8[8192]{0}', space=vmem, size = 0x2000, scoped, tag = 'output window, operand 0, single buffered']
    %8 = vsyncpa [#allocation3], 0
    %9 = vsyncpa [#allocation4], 0
    // Predicated region
    $region2: #{tpu_custom_call.1} parent=1 // pred_check
      _
    $region3: #{tpu_custom_call.1} parent=1 // pred_check_branch
      %11 = sbr.rel (0) target = $region5
    $region4: #{tpu_custom_call.1} parent=1 // pred_region
      %13 = vsyncadd [#allocation3], 0
      %s14 = sshll.u32 %s0, 4
      %s15 = int_to_ptr.hbm [resolvable:$true] %s14
      %s16 = sshll.u32 [#allocation2], 4
      %s17 = int_to_ptr.vmem [resolvable:$true] %s16
      %22 = dma.hbm_to_vmem [thread:$0]  %s15, 256, %s17, [#allocation3], 128, 128, 8
    $region5: #{tpu_custom_call.1} parent=1 // pred_fallthru
      _
    // Predicated region
    $region6: #{tpu_custom_call.1} parent=1 // pred_check
      _
    $region7: #{tpu_custom_call.1} parent=1 // pred_check_branch
      %24 = sbr.rel (0) target = $region9
    $region8: #{tpu_custom_call.1} parent=1 // pred_region
      _
    $region9: #{tpu_custom_call.1} parent=1 // pred_fallthru
      _
    // Predicated region
    $region10: #{tpu_custom_call.1} parent=1 // pred_check
      _
    $region11: #{tpu_custom_call.1} parent=1 // pred_check_branch
      %26 = sbr.rel (0) target = $region13
    $region12: #{tpu_custom_call.1} parent=1 // pred_region
      _
    $region13: #{tpu_custom_call.1} parent=1 // pred_fallthru
      _
    // Predicated region
    $region14: #{tpu_custom_call.1} parent=1 // pred_check
      _
    $region15: #{tpu_custom_call.1} parent=1 // pred_check_branch
      %28 = sbr.rel (0) target = $region17
    $region16: #{tpu_custom_call.1} parent=1 // pred_region
      %30 = dma.done [#allocation3], 256
    $region17: #{tpu_custom_call.1} parent=1 // pred_fallthru
      _
    %v31 = vld [vmem:[#allocation2] sm:$0xff]
    %v32 = vld [vmem:[#allocation2 + $0x8] sm:$0xff]
    %35 = vst [vmem:[#allocation1] ss:$2 sm:$0xff] %v31
    %v36 = vld.sshfl [vmem:[#allocation1] sm:$0xff pattern:$0x75316420]
    %v37 = vld.sshfl [vmem:[#allocation1 + $0x8] sm:$0xff pattern:$0x75316420]
    %s38 = scalar_lea.vmem [#allocation1], 16
    %39 = vst [vmem:[%s38] ss:$2 sm:$0xff] %v32
    %v40 = vld.sshfl [vmem:[#allocation1 + $0x10] sm:$0xff pattern:$0x75316420]
    %v41 = vld.sshfl [vmem:[#allocation1 + $0x18] sm:$0xff pattern:$0x75316420]
    %vm46 = vcmask 1043456
    %v47 = vsel %vm46, %v36, 0.0
    %v48 = vsel %vm46, %v37, 0.0
    %v49 = vadd.f32 %v47, %v48
    %50 = vadd.xlane.f32.xlu0 %v49
    %v51 = vpop.xlane.xlu0 %50
    %v52 = vsel %vm46, %v40, 0.0
    %v53 = vsel %vm46, %v41, 0.0
    %v54 = vadd.f32 %v52, %v53
    %55 = vadd.xlane.f32.xlu0 %v54
    %v56 = vpop.xlane.xlu0 %55
    %v57 = vmul.f32 %v51, 0.00390625
    %v58 = vmul.f32 %v56, 0.00390625
    %v59 = vld [vmem:[%s1] sm:$0xf]
    %v60 = vld [vmem:[%s2] sm:$0xf]
    %v61 = vmul.f32 %v57, %v59
    %v62 = vmul.f32 %v58, %v59
    %vm63 = vcmask 3072
    %v64 = vsel %vm63, %v61, 0.0
    %v65 = vrot.slane %v64, 4
    %v66 = vadd.f32 %v64, %v65
    %v67 = vrot.slane %v66, 2
    %v68 = vadd.f32 %v66, %v67
    %v69 = vrot.slane %v68, 1
    %v70 = vadd.f32 %v68, %v69
    %v71 = vsel %vm63, %v62, 0.0
    %v72 = vrot.slane %v71, 4
    %v73 = vadd.f32 %v71, %v72
    %v74 = vrot.slane %v73, 2
    %v75 = vadd.f32 %v73, %v74
    %v76 = vrot.slane %v75, 1
    %v77 = vadd.f32 %v75, %v76
    %v78 = vsub.f32 0.0, %v70
    %v79 = vsub.f32 0.0, %v77
    %v80 = vmul.f32 %v78, 1.442695
    %v81 = vpow.pop %v80
    %v82 = vmul.f32 %v79, 1.442695
    %v83 = vpow.pop %v82
    %v84 = vadd.f32 %v81, 1.0
    %v85 = vadd.f32 %v83, 1.0
    %v86 = vrcp.pop %v84
    %v87 = vmul.f32 %v84, %v86
    %v88 = vsub.f32 1.0, %v87
    %v89 = vmul.f32 %v86, %v88
    %v90 = vadd.f32 %v86, %v89
    %vm91 = vweird.f32 %v84
    %vm92 = vweird.f32 %v86
    %vm93 = vmor %vm91, %vm92
    %v94 = vsel %vm93, %v86, %v90
    %v95 = vand.u32 2147483647, %v84
    %vm96 = vcmp.eq.f32.partialorder %v95, 8.507059e+37
    %v97 = vand.u32 %v84, 2147483648
    %v98 = vor.u32 1.1754944e-38, %v97
    %v99 = vsel %vm96, %v98, %v94
    %v100 = vmul.f32 1.0, %v99
    %v101 = vrcp.pop %v85
    %v102 = vmul.f32 %v85, %v101
    %v103 = vsub.f32 1.0, %v102
    %v104 = vmul.f32 %v101, %v103
    %v105 = vadd.f32 %v101, %v104
    %vm106 = vweird.f32 %v85
    %vm107 = vweird.f32 %v101
    %vm108 = vmor %vm106, %vm107
    %v109 = vsel %vm108, %v101, %v105
    %v110 = vand.u32 2147483647, %v85
    %vm111 = vcmp.eq.f32.partialorder %v110, 8.507059e+37
    %v112 = vand.u32 %v85, 2147483648
    %v113 = vor.u32 1.1754944e-38, %v112
    %v114 = vsel %vm111, %v113, %v109
    %v115 = vmul.f32 1.0, %v114
    %v116 = vmul.f32 %v70, %v100
    %v117 = vmul.f32 %v77, %v115
    %v118 = vmul.f32 %v116, %v60
    %v119 = vmul.f32 %v117, %v60
    %v120 = vadd.f32 %v118, 0.0
    %v121 = vadd.f32 %v119, 0.0
    %v122 = vsub.f32 0.0, %v120
    %v123 = vsub.f32 0.0, %v121
    %v124 = vmul.f32 %v122, 1.442695
    %v125 = vpow.pop %v124
    %v126 = vmul.f32 %v123, 1.442695
    %v127 = vpow.pop %v126
    %v128 = vadd.f32 %v125, 1.0
    %v129 = vadd.f32 %v127, 1.0
    %v130 = vrcp.pop %v128
    %v131 = vmul.f32 %v128, %v130
    %v132 = vsub.f32 1.0, %v131
    %v133 = vmul.f32 %v130, %v132
    %v134 = vadd.f32 %v130, %v133
    %vm135 = vweird.f32 %v128
    %vm136 = vweird.f32 %v130
    %vm137 = vmor %vm135, %vm136
    %v138 = vsel %vm137, %v130, %v134
    %v139 = vand.u32 2147483647, %v128
    %vm140 = vcmp.eq.f32.partialorder %v139, 8.507059e+37
    %v141 = vand.u32 %v128, 2147483648
    %v142 = vor.u32 1.1754944e-38, %v141
    %v143 = vsel %vm140, %v142, %v138
    %v144 = vmul.f32 1.0, %v143
    %v145 = vrcp.pop %v129
    %v146 = vmul.f32 %v129, %v145
    %v147 = vsub.f32 1.0, %v146
    %v148 = vmul.f32 %v145, %v147
    %v149 = vadd.f32 %v145, %v148
    %vm150 = vweird.f32 %v129
    %vm151 = vweird.f32 %v145
    %vm152 = vmor %vm150, %vm151
    %v153 = vsel %vm152, %v145, %v149
    %v154 = vand.u32 2147483647, %v129
    %vm155 = vcmp.eq.f32.partialorder %v154, 8.507059e+37
    %v156 = vand.u32 %v129, 2147483648
    %v157 = vor.u32 1.1754944e-38, %v156
    %v158 = vsel %vm155, %v157, %v153
    %v159 = vmul.f32 1.0, %v158
    %161 = vset.pattern.permute.xlu0 0
    %162 = vperm.xlu0 %161, %v144
    %v163 = vpop.permute.xlu0 %162
    %165 = vset.pattern.permute.xlu0 0
    %166 = vperm.xlu0 %165, %v159
    %v167 = vpop.permute.xlu0 %166
    %v169 = vunpack.c.l.s4 839922192
    %v170 = vunpack.c.0.s8 %v169
    %v171 = vperm.slane %v163, %v170
    %v173 = vunpack.c.l.s4 839922192
    %v174 = vunpack.c.0.s8 %v173
    %v175 = vperm.slane %v167, %v174
    %v178 = vmul.f32 %v31, %v171
    %v179 = vmul.f32 %v32, %v175
    %180 = vst [vmem:[#allocation5] sm:$0xff] %v178
    %181 = vst [vmem:[#allocation5 + $0x8] sm:$0xff] %v179
    // Predicated region
    $region18: #{tpu_custom_call.1} parent=1 // pred_check
      _
    $region19: #{tpu_custom_call.1} parent=1 // pred_check_branch
      %183 = sbr.rel (0) target = $region21
    $region20: #{tpu_custom_call.1} parent=1 // pred_region
      %185 = vsyncadd [#allocation4], 0
      %s186 = sshll.u32 [#allocation5], 4
      %s187 = int_to_ptr.vmem [resolvable:$true] %s186
      %s188 = sshll.u32 %s3, 4
      %s189 = int_to_ptr.hbm [resolvable:$true] %s188
      %194 = dma.vmem_to_hbm [thread:$0]  %s187, 256, %s189, [#allocation4], 128, 128, 8
    $region21: #{tpu_custom_call.1} parent=1 // pred_fallthru
      _
    // Predicated region
    $region22: #{tpu_custom_call.1} parent=1 // pred_check
      _
    $region23: #{tpu_custom_call.1} parent=1 // pred_check_branch
      %196 = sbr.rel (0) target = $region25
    $region24: #{tpu_custom_call.1} parent=1 // pred_region
      %198 = dma.done [#allocation4], 256
    $region25: #{tpu_custom_call.1} parent=1 // pred_fallthru
      _
    %199 = vsyncpa [#allocation3], 1
    %200 = vsyncpa [#allocation4], 1

</llo_original>
